<compile_context>
chip_gen: v6e
topology: v6e:2x2x1
jax: 0.10.0
libtpu: 0.0.40
codegen_flags: <defaults>
</compile_context>

<pallas_src>
import jax
import jax.numpy as jnp
from jax.experimental import pallas as pl
from jax.experimental.pallas import tpu as pltpu

_SUBLANE = 8    # f32 sublane
_LANE = 128     # lane width


def _round_up(v, m):
    return (v + m - 1) // m * m


# --------------------------------------------------------------------------
# Kernels
# --------------------------------------------------------------------------

def _resident_kernel(x_ref, whcat_ref, bhcat_ref, wc_ref, bc_ref, wo_ref,
                     bo_ref, out_ref, hall_scr):
    """Fully VMEM-resident path, L >= 2, levels unrolled.

    All L horizontal paths are one lane-dense MXU matmul against the
    concatenated (Dip, L*Hp) weight; only the connector tanh recurrence and
    the running output sum stay sequential.  h_all lands in an explicit VMEM
    scratch so the unrolled level loop never keeps a (Bp, L*Hp) value live in
    vregs.
    """
    L = out_ref.shape[0]
    Hp = wc_ref.shape[-1]
    cdt = whcat_ref.dtype  # weight compute dtype (f32 or bf16)

    hall_scr[...] = (
        jnp.dot(x_ref[...].astype(cdt), whcat_ref[...],
                preferred_element_type=jnp.float32) + bhcat_ref[...])

    # Level 0.
    h_prev = jnp.tanh(hall_scr[:, :Hp])
    o_cum = jnp.dot(h_prev.astype(cdt), wo_ref[0],
                    preferred_element_type=jnp.float32) + bo_ref[0]
    out_ref[0] = o_cum.astype(out_ref.dtype)

    # Levels 1..L-1: only the connector path is truly sequential.
    # NOTE: per-level matmuls are M-starved at tiny batch (Bp=8); for large B
    # a 128/256-row batch tile would be the next lever.
    for l in range(1, L):
        vert = jnp.dot(h_prev.astype(cdt), wc_ref[l - 1],
                       preferred_element_type=jnp.float32) + bc_ref[l - 1]
        h_prev = jnp.tanh(hall_scr[:, l * Hp:(l + 1) * Hp] + vert)
        o_cum = o_cum + jnp.dot(h_prev.astype(cdt), wo_ref[l],
                                preferred_element_type=jnp.float32) + bo_ref[l]
        out_ref[l] = o_cum.astype(out_ref.dtype)


def _resident_kernel_l1(x_ref, wh_ref, bh_ref, wo_ref, bo_ref, out_ref):
    """L == 1 specialization: plain FFN, no connector operands at all."""
    cdt = wh_ref.dtype
    h = jnp.tanh(jnp.dot(x_ref[...].astype(cdt), wh_ref[...],
                         preferred_element_type=jnp.float32) + bh_ref[...])
    o = jnp.dot(h.astype(cdt), wo_ref[0],
                preferred_element_type=jnp.float32) + bo_ref[0]
    out_ref[0] = o.astype(out_ref.dtype)


def _streamed_kernel(x_ref, wh_ref, bh_ref, wc_ref, bc_ref, wo_ref, bo_ref,
                     out_ref, h_scr, o_scr):
    """Grid over levels (large-H path, v7x 64 MiB VMEM).

    Per-level weights are streamed/double-buffered by BlockSpec (prefetch of
    level l+1 weights overlaps level l compute); h_prev and the cumulative
    output live in VMEM scratch across grid steps.
    """
    l = pl.program_id(0)
    cdt = wh_ref.dtype

    @pl.when(l == 0)
    def _():
        h_scr[...] = jnp.zeros_like(h_scr)
        o_scr[...] = jnp.zeros_like(o_scr)

    gate = (l > 0).astype(jnp.float32)
    horiz = jnp.dot(x_ref[...].astype(cdt), wh_ref[0],
                    preferred_element_type=jnp.float32) + bh_ref[0]
    vert = jnp.dot(h_scr[...].astype(cdt), wc_ref[0],
                   preferred_element_type=jnp.float32) + bc_ref[0]
    h = jnp.tanh(horiz + gate * vert)        # connector gated off at level 0
    h_scr[...] = h
    o = (jnp.dot(h.astype(cdt), wo_ref[0],
                 preferred_element_type=jnp.float32) + bo_ref[0] + o_scr[...])
    o_scr[...] = o
    out_ref[0] = o.astype(out_ref.dtype)


# --------------------------------------------------------------------------
# Host-side packing (call ONCE) and forward wrapper (call per step)
# --------------------------------------------------------------------------

def pack_params(wh, bh, wc, bc, wo, bo, *, weight_dtype=jnp.float32):
    """Pad + pre-pack weights once. Natural params, weights pre-transposed:
         wh: (L, D_in, H),  bh: (L, H)
         wc: (L-1, H, H),   bc: (L-1, H)      (empty when L == 1)
         wo: (L, H, D_out), bo: (L, D_out)
       Returns (meta, arrays); only x padding remains per forward call."""
    L, D_in, H = wh.shape
    D_out = wo.shape[-1]
    Dip = _round_up(D_in, _LANE)
    Hp = _round_up(H, _LANE)
    Dop = _round_up(D_out, _LANE)

    f32 = jnp.float32
    wdt = weight_dtype

    wh_p = jnp.zeros((L, Dip, Hp), wdt).at[:, :D_in, :H].set(wh.astype(wdt))
    bh_p = jnp.zeros((L, 1, Hp), f32).at[:, 0, :H].set(bh.astype(f32))
    # Concatenated horizontal weights for the fully-resident path:
    # whcat[:, l*Hp:(l+1)*Hp] == wh[l].
    whcat = jnp.transpose(wh_p, (1, 0, 2)).reshape(Dip, L * Hp)
    bhcat = jnp.transpose(bh_p, (1, 0, 2)).reshape(1, L * Hp)

    wo_p = jnp.zeros((L, Hp, Dop), wdt).at[:, :H, :D_out].set(wo.astype(wdt))
    bo_p = jnp.zeros((L, 1, Dop), f32).at[:, 0, :D_out].set(bo.astype(f32))

    if L > 1:
        wc_p = jnp.zeros((L - 1, Hp, Hp), wdt).at[:, :H, :H].set(wc.astype(wdt))
        bc_p = jnp.zeros((L - 1, 1, Hp), f32).at[:, 0, :H].set(bc.astype(f32))
    else:
        wc_p, bc_p = None, None

    meta = dict(L=L, D_in=D_in, H=H, D_out=D_out, Dip=Dip, Hp=Hp, Dop=Dop)
    arrays = dict(wh_p=wh_p, bh_p=bh_p, whcat=whcat, bhcat=bhcat,
                  wc_p=wc_p, bc_p=bc_p, wo_p=wo_p, bo_p=bo_p)
    return meta, arrays


def _vmem_budget_bytes():
    """Generation-aware scoped-VMEM budget (~0.8x physical capacity)."""
    try:
        cap = int(pltpu.get_tpu_info().vmem_capacity_bytes)
    except Exception:
        cap = 128 * 1024 * 1024
    return int(0.8 * cap)


def _nbytes(a):
    return int(a.size) * a.dtype.itemsize


def deep_feed_forward(x, meta, arrays, *, force_streamed=False):
    """x: (B, D_in) -> (L, B, D_out) float32, matching DeepFeedForward.forward
       (eval mode; dropout_rate=0 / .detach() are forward no-ops)."""
    B, D_in = x.shape
    L, Hp, Dip, Dop = meta["L"], meta["Hp"], meta["Dip"], meta["Dop"]
    D_out = meta["D_out"]
    Bp = _round_up(B, _SUBLANE)
    f32 = jnp.float32

    # Per-call work: pad only x.
    x_p = jnp.zeros((Bp, Dip), f32).at[:B, :D_in].set(x.astype(f32))

    out_shape = jax.ShapeDtypeStruct((L, Bp, Dop), f32)
    vmem_spec = pl.BlockSpec(memory_space=pltpu.MemorySpace.VMEM)
    budget = _vmem_budget_bytes()

    if L == 1:
        operands = (x_p, arrays["whcat"], arrays["bhcat"],
                    arrays["wo_p"], arrays["bo_p"])
        est = int(1.3 * (sum(_nbytes(a) for a in operands)
                         + 4 * (L * Bp * Dop + Bp * Hp)))
        out_p = pl.pallas_call(
            _resident_kernel_l1,
            out_shape=out_shape,
            in_specs=[vmem_spec] * len(operands),
            out_specs=vmem_spec,
            compiler_params=pltpu.CompilerParams(
                vmem_limit_bytes=min(budget, max(16 << 20, est))),
        )(*operands)
        return out_p[:, :B, :D_out]

    resident_operands = (x_p, arrays["whcat"], arrays["bhcat"], arrays["wc_p"],
                         arrays["bc_p"], arrays["wo_p"], arrays["bo_p"])
    resident_est = int(1.3 * (sum(_nbytes(a) for a in resident_operands)
                              + 4 * (L * Bp * Dop)      # output
                              + 4 * (Bp * L * Hp)))     # h_all scratch
    use_streamed = force_streamed or resident_est > budget

    if not use_streamed:
        # Fast path: everything resident, no grid, no per-step pipeline cost.
        # NOTE: for B in the hundreds a leading "parallel" batch-tile axis
        # would let v7x use both TensorCores.
        out_p = pl.pallas_call(
            _resident_kernel,
            out_shape=out_shape,
            in_specs=[vmem_spec] * len(resident_operands),
            out_specs=vmem_spec,
            scratch_shapes=[pltpu.VMEM((Bp, L * Hp), f32)],
            compiler_params=pltpu.CompilerParams(
                vmem_limit_bytes=min(budget, max(16 << 20, resident_est))),
        )(*resident_operands)
        return out_p[:, :B, :D_out]

    # Streamed path: grid over levels; per-level weights double-buffered.
    wbytes = arrays["wh_p"].dtype.itemsize
    per_level = (Dip * Hp + Hp * Hp + Hp * Dop) * wbytes + (2 * Hp + Dop) * 4
    streamed_est = int(1.5 * (_nbytes(x_p) + 2 * per_level
                              + 2 * Bp * Dop * 4          # out double buffer
                              + 4 * (Bp * Hp + Bp * Dop)))  # carries
    operands = (x_p, arrays["wh_p"], arrays["bh_p"], arrays["wc_p"],
                arrays["bc_p"], arrays["wo_p"], arrays["bo_p"])
    in_specs = [
        pl.BlockSpec((Bp, Dip), lambda l: (0, 0)),
        pl.BlockSpec((1, Dip, Hp), lambda l: (l, 0, 0)),
        pl.BlockSpec((1, 1, Hp), lambda l: (l, 0, 0)),
        pl.BlockSpec((1, Hp, Hp), lambda l: (jnp.maximum(l - 1, 0), 0, 0)),
        pl.BlockSpec((1, 1, Hp), lambda l: (jnp.maximum(l - 1, 0), 0, 0)),
        pl.BlockSpec((1, Hp, Dop), lambda l: (l, 0, 0)),
        pl.BlockSpec((1, 1, Dop), lambda l: (l, 0, 0)),
    ]
    out_p = pl.pallas_call(
        _streamed_kernel,
        out_shape=out_shape,
        grid=(L,),
        in_specs=in_specs,
        out_specs=pl.BlockSpec((1, Bp, Dop), lambda l: (l, 0, 0)),
        scratch_shapes=[pltpu.VMEM((Bp, Hp), f32),
                        pltpu.VMEM((Bp, Dop), f32)],
        compiler_params=pltpu.CompilerParams(
            dimension_semantics=("arbitrary",),
            vmem_limit_bytes=min(budget, max(16 << 20, streamed_est))),
    )(*operands)
    return out_p[:, :B, :D_out]


# --------------------------------------------------------------------------
# Parameter construction + pure-JAX reference (for the self-test)
# --------------------------------------------------------------------------

def _init_linear(key, fan_in, fan_out):
    """PyTorch nn.Linear default init: U(-1/sqrt(fan_in), 1/sqrt(fan_in)).
       Weight returned already transposed to (fan_in, fan_out)."""
    kw, kb = jax.random.split(key)
    bound = 1.0 / jnp.sqrt(fan_in)
    w = jax.random.uniform(kw, (fan_in, fan_out), jnp.float32, -bound, bound)
    b = jax.random.uniform(kb, (fan_out,), jnp.float32, -bound, bound)
    return w, b


def make_params(key, input_dim, hidden_dim, output_dim, deepness):
    keys = jax.random.split(key, 3 * deepness)
    wh, bh, wc, bc, wo, bo = [], [], [], [], [], []
    for lvl in range(deepness):
        w, b = _init_linear(keys[3 * lvl + 0], input_dim, hidden_dim)
        wh.append(w); bh.append(b)
        if lvl > 0:
            w, b = _init_linear(keys[3 * lvl + 1], hidden_dim, hidden_dim)
            wc.append(w); bc.append(b)
        w, b = _init_linear(keys[3 * lvl + 2], hidden_dim, output_dim)
        wo.append(w); bo.append(b)
    wc_arr = (jnp.stack(wc) if wc
              else jnp.zeros((0, hidden_dim, hidden_dim), jnp.float32))
    bc_arr = (jnp.stack(bc) if bc
              else jnp.zeros((0, hidden_dim), jnp.float32))
    return (jnp.stack(wh), jnp.stack(bh), wc_arr, bc_arr,
            jnp.stack(wo), jnp.stack(bo))


def reference_forward(x, wh, bh, wc, bc, wo, bo):
    """Pure-JAX re-implementation of DeepFeedForward.forward (eval mode)."""
    hp = jax.lax.Precision.HIGHEST
    L = wh.shape[0]
    outs, h_prev, o_prev = [], None, None
    for lvl in range(L):
        h = jnp.dot(x, wh[lvl], precision=hp) + bh[lvl]
        if lvl > 0:
            h = h + jnp.dot(h_prev, wc[lvl - 1], precision=hp) + bc[lvl - 1]
        h = jnp.tanh(h)
        o = jnp.dot(h, wo[lvl], precision=hp) + bo[lvl]
        if lvl > 0:
            o = o + o_prev
        outs.append(o)
        h_prev, o_prev = h, o
    return jnp.stack(outs)


if __name__ == "__main__":
    # TODO(synk): dropout is a no-op here (dropout_rate=0.0 / eval mode) and
    # .detach() only affects gradients, so neither appears in the kernel.
    batch, input_dim, hidden_dim, output_dim, deepness = 2, 4, 32, 8, 3

    key = jax.random.PRNGKey(0)
    kx, kp = jax.random.split(key)
    x = jax.random.normal(kx, (batch, input_dim), jnp.float32)
    params = make_params(kp, input_dim, hidden_dim, output_dim, deepness)
    ref = reference_forward(x, *params)

    # Pack/pad/concat the weight stack ONCE (hoisted out of the per-call path).
    meta, arrays = pack_params(*params)

    # 1) Fast fully-resident path (f32 weights).
    out = jax.block_until_ready(deep_feed_forward(x, meta, arrays))
    assert out.shape == (deepness, batch, output_dim), out.shape
    assert jnp.allclose(out, ref, atol=1e-5, rtol=1e-5), (
        float(jnp.max(jnp.abs(out - ref))))

    # 2) Streamed (grid-over-levels) path, as used for large H on v7x.
    out_s = jax.block_until_ready(
        deep_feed_forward(x, meta, arrays, force_streamed=True))
    assert jnp.allclose(out_s, ref, atol=1e-5, rtol=1e-5), (
        float(jnp.max(jnp.abs(out_s - ref))))

    # 3) bf16-weights path (f32 accumulation), loose tolerance.
    meta16, arrays16 = pack_params(*params, weight_dtype=jnp.bfloat16)
    out16 = jax.block_until_ready(deep_feed_forward(x, meta16, arrays16))
    assert out16.shape == (deepness, batch, output_dim)
    assert float(jnp.max(jnp.abs(out16 - ref))) < 0.1

    # 4) L == 1 specialization (no dummy connector operand).
    params1 = make_params(kp, input_dim, hidden_dim, output_dim, 1)
    meta1, arrays1 = pack_params(*params1)
    out1 = jax.block_until_ready(deep_feed_forward(x, meta1, arrays1))
    ref1 = reference_forward(x, *params1)
    assert out1.shape == (1, batch, output_dim)
    assert jnp.allclose(out1, ref1, atol=1e-5, rtol=1e-5), (
        float(jnp.max(jnp.abs(out1 - ref1))))

    print("KERNEL_OK")
</pallas_src>

<mosaic_0001>
module attributes {stable_mosaic.version = 11 : i64} {
  func.func @_resident_kernel(%arg0: memref<8x128xf32, #tpu.memory_space<vmem>>, %arg1: memref<128x384xf32, #tpu.memory_space<vmem>>, %arg2: memref<1x384xf32, #tpu.memory_space<vmem>>, %arg3: memref<2x128x128xf32, #tpu.memory_space<vmem>>, %arg4: memref<2x1x128xf32, #tpu.memory_space<vmem>>, %arg5: memref<3x128x128xf32, #tpu.memory_space<vmem>>, %arg6: memref<3x1x128xf32, #tpu.memory_space<vmem>>, %arg7: memref<3x8x128xf32, #tpu.memory_space<vmem>>, %arg8: memref<8x384xf32, #tpu.memory_space<vmem>>) attributes {dimension_semantics = [], scalar_prefetch = 0 : i64, scratch_operands = 1 : i64, tpu.core_type = #tpu.core_type<tc>} {
    %c0 = arith.constant 0 : index
    %c0_0 = arith.constant 0 : index
    %0 = vector.load %arg0[%c0, %c0_0] : memref<8x128xf32, #tpu.memory_space<vmem>>, vector<8x128xf32>
    %c0_1 = arith.constant 0 : index
    %c0_2 = arith.constant 0 : index
    %1 = vector.load %arg1[%c0_1, %c0_2] : memref<128x384xf32, #tpu.memory_space<vmem>>, vector<128x384xf32>
    %cst = arith.constant dense<0.000000e+00> : vector<8x384xf32>
    %2 = tpu.matmul %0, %1, %cst {dimension_numbers = #tpu.dot_dimension_numbers<[1], [0], [0], [1], [0, 0, 1, 1], [], []>} : vector<8x128xf32>, vector<128x384xf32>, vector<8x384xf32> -> vector<8x384xf32>
    %c0_3 = arith.constant 0 : index
    %c0_4 = arith.constant 0 : index
    %3 = vector.load %arg2[%c0_3, %c0_4] : memref<1x384xf32, #tpu.memory_space<vmem>>, vector<1x384xf32>
    %4 = vector.broadcast %3 : vector<1x384xf32> to vector<8x384xf32>
    %5 = arith.addf %2, %4 : vector<8x384xf32>
    %c0_5 = arith.constant 0 : index
    %c0_6 = arith.constant 0 : index
    %6 = vector.load %arg8[%c0_5, %c0_6] : memref<8x384xf32, #tpu.memory_space<vmem>>, vector<8x384xf32>
    tpu.vector_store %arg8[%c0_5, %c0_6], %5 {strides = array<i32>} : memref<8x384xf32, #tpu.memory_space<vmem>>, vector<8x384xf32>,
    %c0_7 = arith.constant 0 : index
    %c0_8 = arith.constant 0 : index
    %7 = vector.load %arg8[%c0_7, %c0_8] : memref<8x384xf32, #tpu.memory_space<vmem>>, vector<8x128xf32>
    %8 = math.tanh %7 : vector<8x128xf32>
    %c0_9 = arith.constant 0 : index
    %c0_10 = arith.constant 0 : index
    %c0_11 = arith.constant 0 : index
    %9 = vector.load %arg5[%c0_9, %c0_10, %c0_11] : memref<3x128x128xf32, #tpu.memory_space<vmem>>, vector<1x128x128xf32>
    %10 = vector.shape_cast %9 : vector<1x128x128xf32> to vector<128x128xf32>
    %cst_12 = arith.constant dense<0.000000e+00> : vector<8x128xf32>
    %11 = tpu.matmul %8, %10, %cst_12 {dimension_numbers = #tpu.dot_dimension_numbers<[1], [0], [0], [1], [0, 0, 1, 1], [], []>} : vector<8x128xf32>, vector<128x128xf32>, vector<8x128xf32> -> vector<8x128xf32>
    %c0_13 = arith.constant 0 : index
    %c0_14 = arith.constant 0 : index
    %c0_15 = arith.constant 0 : index
    %12 = vector.load %arg6[%c0_13, %c0_14, %c0_15] : memref<3x1x128xf32, #tpu.memory_space<vmem>>, vector<1x1x128xf32>
    %13 = vector.shape_cast %12 : vector<1x1x128xf32> to vector<1x128xf32>
    %14 = vector.broadcast %13 : vector<1x128xf32> to vector<8x128xf32>
    %15 = arith.addf %11, %14 : vector<8x128xf32>
    %c0_16 = arith.constant 0 : index
    %c0_17 = arith.constant 0 : index
    %c0_18 = arith.constant 0 : index
    %16 = vector.load %arg7[%c0_16, %c0_17, %c0_18] : memref<3x8x128xf32, #tpu.memory_space<vmem>>, vector<1x8x128xf32>
    %17 = vector.shape_cast %16 : vector<1x8x128xf32> to vector<8x128xf32>
    %18 = vector.shape_cast %15 : vector<8x128xf32> to vector<1x8x128xf32>
    tpu.vector_store %arg7[%c0_16, %c0_17, %c0_18], %18 {strides = array<i32>} : memref<3x8x128xf32, #tpu.memory_space<vmem>>, vector<1x8x128xf32>,
    %c0_19 = arith.constant 0 : index
    %c0_20 = arith.constant 0 : index
    %c0_21 = arith.constant 0 : index
    %19 = vector.load %arg3[%c0_19, %c0_20, %c0_21] : memref<2x128x128xf32, #tpu.memory_space<vmem>>, vector<1x128x128xf32>
    %20 = vector.shape_cast %19 : vector<1x128x128xf32> to vector<128x128xf32>
    %cst_22 = arith.constant dense<0.000000e+00> : vector<8x128xf32>
    %21 = tpu.matmul %8, %20, %cst_22 {dimension_numbers = #tpu.dot_dimension_numbers<[1], [0], [0], [1], [0, 0, 1, 1], [], []>} : vector<8x128xf32>, vector<128x128xf32>, vector<8x128xf32> -> vector<8x128xf32>
    %c0_23 = arith.constant 0 : index
    %c0_24 = arith.constant 0 : index
    %c0_25 = arith.constant 0 : index
    %22 = vector.load %arg4[%c0_23, %c0_24, %c0_25] : memref<2x1x128xf32, #tpu.memory_space<vmem>>, vector<1x1x128xf32>
    %23 = vector.shape_cast %22 : vector<1x1x128xf32> to vector<1x128xf32>
    %24 = vector.broadcast %23 : vector<1x128xf32> to vector<8x128xf32>
    %25 = arith.addf %21, %24 : vector<8x128xf32>
    %c0_26 = arith.constant 0 : index
    %c128 = arith.constant 128 : index
    %26 = vector.load %arg8[%c0_26, %c128] : memref<8x384xf32, #tpu.memory_space<vmem>>, vector<8x128xf32>
    %27 = arith.addf %26, %25 : vector<8x128xf32>
    %28 = math.tanh %27 : vector<8x128xf32>
    %c1 = arith.constant 1 : index
    %c0_27 = arith.constant 0 : index
    %c0_28 = arith.constant 0 : index
    %29 = vector.load %arg5[%c1, %c0_27, %c0_28] : memref<3x128x128xf32, #tpu.memory_space<vmem>>, vector<1x128x128xf32>
    %30 = vector.shape_cast %29 : vector<1x128x128xf32> to vector<128x128xf32>
    %cst_29 = arith.constant dense<0.000000e+00> : vector<8x128xf32>
    %31 = tpu.matmul %28, %30, %cst_29 {dimension_numbers = #tpu.dot_dimension_numbers<[1], [0], [0], [1], [0, 0, 1, 1], [], []>} : vector<8x128xf32>, vector<128x128xf32>, vector<8x128xf32> -> vector<8x128xf32>
    %32 = arith.addf %15, %31 : vector<8x128xf32>
    %c1_30 = arith.constant 1 : index
    %c0_31 = arith.constant 0 : index
    %c0_32 = arith.constant 0 : index
    %33 = vector.load %arg6[%c1_30, %c0_31, %c0_32] : memref<3x1x128xf32, #tpu.memory_space<vmem>>, vector<1x1x128xf32>
    %34 = vector.shape_cast %33 : vector<1x1x128xf32> to vector<1x128xf32>
    %35 = vector.broadcast %34 : vector<1x128xf32> to vector<8x128xf32>
    %36 = arith.addf %32, %35 : vector<8x128xf32>
    %c1_33 = arith.constant 1 : index
    %c0_34 = arith.constant 0 : index
    %c0_35 = arith.constant 0 : index
    %37 = vector.load %arg7[%c1_33, %c0_34, %c0_35] : memref<3x8x128xf32, #tpu.memory_space<vmem>>, vector<1x8x128xf32>
    %38 = vector.shape_cast %37 : vector<1x8x128xf32> to vector<8x128xf32>
    %39 = vector.shape_cast %36 : vector<8x128xf32> to vector<1x8x128xf32>
    tpu.vector_store %arg7[%c1_33, %c0_34, %c0_35], %39 {strides = array<i32>} : memref<3x8x128xf32, #tpu.memory_space<vmem>>, vector<1x8x128xf32>,
    %c1_36 = arith.constant 1 : index
    %c0_37 = arith.constant 0 : index
    %c0_38 = arith.constant 0 : index
    %40 = vector.load %arg3[%c1_36, %c0_37, %c0_38] : memref<2x128x128xf32, #tpu.memory_space<vmem>>, vector<1x128x128xf32>
    %41 = vector.shape_cast %40 : vector<1x128x128xf32> to vector<128x128xf32>
    %cst_39 = arith.constant dense<0.000000e+00> : vector<8x128xf32>
    %42 = tpu.matmul %28, %41, %cst_39 {dimension_numbers = #tpu.dot_dimension_numbers<[1], [0], [0], [1], [0, 0, 1, 1], [], []>} : vector<8x128xf32>, vector<128x128xf32>, vector<8x128xf32> -> vector<8x128xf32>
    %c1_40 = arith.constant 1 : index
    %c0_41 = arith.constant 0 : index
    %c0_42 = arith.constant 0 : index
    %43 = vector.load %arg4[%c1_40, %c0_41, %c0_42] : memref<2x1x128xf32, #tpu.memory_space<vmem>>, vector<1x1x128xf32>
    %44 = vector.shape_cast %43 : vector<1x1x128xf32> to vector<1x128xf32>
    %45 = vector.broadcast %44 : vector<1x128xf32> to vector<8x128xf32>
    %46 = arith.addf %42, %45 : vector<8x128xf32>
    %c0_43 = arith.constant 0 : index
    %c256 = arith.constant 256 : index
    %47 = vector.load %arg8[%c0_43, %c256] : memref<8x384xf32, #tpu.memory_space<vmem>>, vector<8x128xf32>
    %48 = arith.addf %47, %46 : vector<8x128xf32>
    %49 = math.tanh %48 : vector<8x128xf32>
    %c2 = arith.constant 2 : index
    %c0_44 = arith.constant 0 : index
    %c0_45 = arith.constant 0 : index
    %50 = vector.load %arg5[%c2, %c0_44, %c0_45] : memref<3x128x128xf32, #tpu.memory_space<vmem>>, vector<1x128x128xf32>
    %51 = vector.shape_cast %50 : vector<1x128x128xf32> to vector<128x128xf32>
    %cst_46 = arith.constant dense<0.000000e+00> : vector<8x128xf32>
    %52 = tpu.matmul %49, %51, %cst_46 {dimension_numbers = #tpu.dot_dimension_numbers<[1], [0], [0], [1], [0, 0, 1, 1], [], []>} : vector<8x128xf32>, vector<128x128xf32>, vector<8x128xf32> -> vector<8x128xf32>
    %53 = arith.addf %36, %52 : vector<8x128xf32>
    %c2_47 = arith.constant 2 : index
    %c0_48 = arith.constant 0 : index
    %c0_49 = arith.constant 0 : index
    %54 = vector.load %arg6[%c2_47, %c0_48, %c0_49] : memref<3x1x128xf32, #tpu.memory_space<vmem>>, vector<1x1x128xf32>
    %55 = vector.shape_cast %54 : vector<1x1x128xf32> to vector<1x128xf32>
    %56 = vector.broadcast %55 : vector<1x128xf32> to vector<8x128xf32>
    %57 = arith.addf %53, %56 : vector<8x128xf32>
    %c2_50 = arith.constant 2 : index
    %c0_51 = arith.constant 0 : index
    %c0_52 = arith.constant 0 : index
    %58 = vector.load %arg7[%c2_50, %c0_51, %c0_52] : memref<3x8x128xf32, #tpu.memory_space<vmem>>, vector<1x8x128xf32>
    %59 = vector.shape_cast %58 : vector<1x8x128xf32> to vector<8x128xf32>
    %60 = vector.shape_cast %57 : vector<8x128xf32> to vector<1x8x128xf32>
    tpu.vector_store %arg7[%c2_50, %c0_51, %c0_52], %60 {strides = array<i32>} : memref<3x8x128xf32, #tpu.memory_space<vmem>>, vector<1x8x128xf32>,
    return
  }
}

</mosaic_0001>

<llo_original>
// kernel: tpu_custom_call.1
$region0: #{tpu_custom_call.1}
  #allocation0 [shape = 'u32[]', space=smem, size = 0x4, offset = 0x4, fixed_abs, tag = 'smem constant byte address 0x4 - core index']
  #allocation1 [shape = 'u32[144,128]{1,0:T(1,128)}', space=vmem, size = 0x12000, scoped, tag = 'internal scratch']
  #allocation2 [shape = 'f32[8,384]{1,0:T(8,128)}', space=vmem, size = 0x3000, scoped, tag = 'scratch operand']
  %s0 = inlined_call_operand.hbm [shape: f32[8,128], index: 0, kind: input, shape index: {}]
  %s1 = inlined_call_operand.hbm [shape: f32[128,384], index: 1, kind: input, shape index: {}]
  %s2 = inlined_call_operand.vmem [shape: f32[1,384], index: 2, kind: input, shape index: {}]
  %s3 = inlined_call_operand.hbm [shape: f32[2,128,128], index: 3, kind: input, shape index: {}]
  %s4 = inlined_call_operand.hbm [shape: f32[2,1,128], index: 4, kind: input, shape index: {}]
  %s5 = inlined_call_operand.hbm [shape: f32[3,128,128], index: 5, kind: input, shape index: {}]
  %s6 = inlined_call_operand.vmem [shape: f32[3,1,128], index: 6, kind: input, shape index: {}]
  %s7 = inlined_call_operand.hbm [shape: f32[3,8,128], index: 7, kind: output, shape index: {}]
  %s8 = sld [smem:[#allocation0]]
  $region58: #{tpu_custom_call.1} parent=0
    _
  %s10 = ssub.s32 1, %s8
  %s11 = scalar_select 0, %s10, %s8
  $region1: #{tpu_custom_call.1} parent=0
    #allocation3 [shape = 'u8[4096]{0}', space=vmem, size = 0x1000, scoped, tag = 'input window, operand 0, single buffered']
    #allocation4 [shape = 's32[1]{0}', space=sflag, size = 0x4, scoped, tag = 'scoped memory for tpu_custom_call.1']
    #allocation5 [shape = 's32[1]{0}', space=sflag, size = 0x4, scoped, tag = 'scoped memory for tpu_custom_call.1']
    #allocation6 [shape = 'u8[196608]{0}', space=vmem, size = 0x30000, scoped, tag = 'input window, operand 1, single buffered']
    #allocation7 [shape = 's32[1]{0}', space=sflag, size = 0x4, scoped, tag = 'scoped memory for tpu_custom_call.1']
    #allocation8 [shape = 'u8[131072]{0}', space=vmem, size = 0x20000, scoped, tag = 'input window, operand 3, single buffered']
    #allocation9 [shape = 'u8[1024]{0}', space=vmem, size = 0x400, scoped, tag = 'input window, operand 4, single buffered']
    #allocation10 [shape = 's32[1]{0}', space=sflag, size = 0x4, scoped, tag = 'scoped memory for tpu_custom_call.1']
    #allocation11 [shape = 'u8[196608]{0}', space=vmem, size = 0x30000, scoped, tag = 'input window, operand 5, single buffered']
    #allocation12 [shape = 'u8[12288]{0}', space=vmem, size = 0x3000, scoped, tag = 'output window, operand 0, single buffered']
    %12 = vsyncpa [#allocation4], 0
    %13 = vsyncpa [#allocation7], 0
    %14 = vsyncpa [#allocation10], 0
    %15 = vsyncpa [#allocation5], 0
    // Predicated region
    $region2: #{tpu_custom_call.1} parent=1 // pred_check
      _
    $region3: #{tpu_custom_call.1} parent=1 // pred_check_branch
      %17 = sbr.rel (0) target = $region5
    $region4: #{tpu_custom_call.1} parent=1 // pred_region
      %s19 = ssub.s32 128, 128
      %20 = vsyncadd [#allocation4], %s19
      %s22 = sshll.u32 [#allocation3], 4
      %s23 = int_to_ptr.vmem [resolvable:$true] %s22
      %25 = dma.hbm_to_vmem [thread:$0]  %s0, 128, %s23, [#allocation4]
    $region5: #{tpu_custom_call.1} parent=1 // pred_fallthru
      _
    // Predicated region
    $region6: #{tpu_custom_call.1} parent=1 // pred_check
      _
    $region7: #{tpu_custom_call.1} parent=1 // pred_check_branch
      %27 = sbr.rel (0) target = $region9
    $region8: #{tpu_custom_call.1} parent=1 // pred_region
      %s29 = ssub.s32 6144, 6144
      %30 = vsyncadd [#allocation7], %s29
      %s31 = sshll.u32 [#allocation6], 4
      %s32 = int_to_ptr.vmem [resolvable:$true] %s31
      %37 = dma.hbm_to_vmem [thread:$0]  %s1, 6144, %s32, [#allocation7], 384, 384, 24
    $region9: #{tpu_custom_call.1} parent=1 // pred_fallthru
      _
    // Predicated region
    $region10: #{tpu_custom_call.1} parent=1 // pred_check
      _
    $region11: #{tpu_custom_call.1} parent=1 // pred_check_branch
      %39 = sbr.rel (0) target = $region13
    $region12: #{tpu_custom_call.1} parent=1 // pred_region
      _
    $region13: #{tpu_custom_call.1} parent=1 // pred_fallthru
      _
    // Predicated region
    $region14: #{tpu_custom_call.1} parent=1 // pred_check
      _
    $region15: #{tpu_custom_call.1} parent=1 // pred_check_branch
      %41 = sbr.rel (0) target = $region17
    $region16: #{tpu_custom_call.1} parent=1 // pred_region
      %s43 = ssub.s32 4096, 4096
      %44 = vsyncadd [#allocation7], %s43
      %s45 = sshll.u32 [#allocation8], 4
      %s46 = int_to_ptr.vmem [resolvable:$true] %s45
      %51 = dma.hbm_to_vmem [thread:$0]  %s3, 4096, %s46, [#allocation7], 128, 128, 8
    $region17: #{tpu_custom_call.1} parent=1 // pred_fallthru
      _
    // Predicated region
    $region18: #{tpu_custom_call.1} parent=1 // pred_check
      _
    $region19: #{tpu_custom_call.1} parent=1 // pred_check_branch
      %53 = sbr.rel (0) target = $region21
    $region20: #{tpu_custom_call.1} parent=1 // pred_region
      %s55 = ssub.s32 32, 32
      %56 = vsyncadd [#allocation10], %s55
      %s57 = sshll.u32 [#allocation9], 4
      %s58 = int_to_ptr.vmem [resolvable:$true] %s57
      %63 = dma.hbm_to_vmem [thread:$0]  %s4, 32, %s58, [#allocation10], 16, 16, 1
    $region21: #{tpu_custom_call.1} parent=1 // pred_fallthru
      _
    // Predicated region
    $region22: #{tpu_custom_call.1} parent=1 // pred_check
      _
    $region23: #{tpu_custom_call.1} parent=1 // pred_check_branch
      %65 = sbr.rel (0) target = $region25
    $region24: #{tpu_custom_call.1} parent=1 // pred_region
      %s67 = ssub.s32 6144, 6144
      %68 = vsyncadd [#allocation10], %s67
      %s69 = sshll.u32 [#allocation11], 4
      %s70 = int_to_ptr.vmem [resolvable:$true] %s69
      %75 = dma.hbm_to_vmem [thread:$0]  %s5, 6144, %s70, [#allocation10], 128, 128, 8
    $region25: #{tpu_custom_call.1} parent=1 // pred_fallthru
      _
    // Predicated region
    $region26: #{tpu_custom_call.1} parent=1 // pred_check
      _
    $region27: #{tpu_custom_call.1} parent=1 // pred_check_branch
      %77 = sbr.rel (0) target = $region29
    $region28: #{tpu_custom_call.1} parent=1 // pred_region
      _
    $region29: #{tpu_custom_call.1} parent=1 // pred_fallthru
      _
    // Predicated region
    $region30: #{tpu_custom_call.1} parent=1 // pred_check
      _
    $region31: #{tpu_custom_call.1} parent=1 // pred_check_branch
      %79 = sbr.rel (0) target = $region33
    $region32: #{tpu_custom_call.1} parent=1 // pred_region
      %80 = dma.done [#allocation4], 128
    $region33: #{tpu_custom_call.1} parent=1 // pred_fallthru
      _
    // Predicated region
    $region34: #{tpu_custom_call.1} parent=1 // pred_check
      _
    $region35: #{tpu_custom_call.1} parent=1 // pred_check_branch
      %82 = sbr.rel (0) target = $region37
    $region36: #{tpu_custom_call.1} parent=1 // pred_region
      %83 = dma.done [#allocation7], 6144
    $region37: #{tpu_custom_call.1} parent=1 // pred_fallthru
      _
    // Predicated region
    $region38: #{tpu_custom_call.1} parent=1 // pred_check
      _
    $region39: #{tpu_custom_call.1} parent=1 // pred_check_branch
      %85 = sbr.rel (0) target = $region41
    $region40: #{tpu_custom_call.1} parent=1 // pred_region
      %86 = dma.done [#allocation7], 4096
    $region41: #{tpu_custom_call.1} parent=1 // pred_fallthru
      _
    // Predicated region
    $region42: #{tpu_custom_call.1} parent=1 // pred_check
      _
    $region43: #{tpu_custom_call.1} parent=1 // pred_check_branch
      %88 = sbr.rel (0) target = $region45
    $region44: #{tpu_custom_call.1} parent=1 // pred_region
      %89 = dma.done [#allocation10], 32
    $region45: #{tpu_custom_call.1} parent=1 // pred_fallthru
      _
    // Predicated region
    $region46: #{tpu_custom_call.1} parent=1 // pred_check
      _
    $region47: #{tpu_custom_call.1} parent=1 // pred_check_branch
      %91 = sbr.rel (0) target = $region49
    $region48: #{tpu_custom_call.1} parent=1 // pred_region
      %92 = dma.done [#allocation10], 6144
    $region49: #{tpu_custom_call.1} parent=1 // pred_fallthru
      _
    %v93 = vld [vmem:[#allocation3] sm:$0xff]
    %v94 = vld [vmem:[#allocation6] sm:$0xff]
    %v95 = vld [vmem:[#allocation6 + $0x8] sm:$0xff]
    %v96 = vld [vmem:[#allocation6 + $0x10] sm:$0xff]
    %v97 = vld [vmem:[#allocation6 + $0x18] sm:$0xff]
    %v98 = vld [vmem:[#allocation6 + $0x20] sm:$0xff]
    %v99 = vld [vmem:[#allocation6 + $0x28] sm:$0xff]
    %v100 = vld [vmem:[#allocation6 + $0x30] sm:$0xff]
    %v101 = vld [vmem:[#allocation6 + $0x38] sm:$0xff]
    %v102 = vld [vmem:[#allocation6 + $0x40] sm:$0xff]
    %v103 = vld [vmem:[#allocation6 + $0x48] sm:$0xff]
    %v104 = vld [vmem:[#allocation6 + $0x50] sm:$0xff]
    %v105 = vld [vmem:[#allocation6 + $0x58] sm:$0xff]
    %v106 = vld [vmem:[#allocation6 + $0x60] sm:$0xff]
    %v107 = vld [vmem:[#allocation6 + $0x68] sm:$0xff]
    %v108 = vld [vmem:[#allocation6 + $0x70] sm:$0xff]
    %v109 = vld [vmem:[#allocation6 + $0x78] sm:$0xff]
    %v110 = vld [vmem:[#allocation6 + $0x80] sm:$0xff]
    %v111 = vld [vmem:[#allocation6 + $0x88] sm:$0xff]
    %v112 = vld [vmem:[#allocation6 + $0x90] sm:$0xff]
    %v113 = vld [vmem:[#allocation6 + $0x98] sm:$0xff]
    %v114 = vld [vmem:[#allocation6 + $0xa0] sm:$0xff]
    %v115 = vld [vmem:[#allocation6 + $0xa8] sm:$0xff]
    %v116 = vld [vmem:[#allocation6 + $0xb0] sm:$0xff]
    %v117 = vld [vmem:[#allocation6 + $0xb8] sm:$0xff]
    %v118 = vld [vmem:[#allocation6 + $0xc0] sm:$0xff]
    %v119 = vld [vmem:[#allocation6 + $0xc8] sm:$0xff]
    %v120 = vld [vmem:[#allocation6 + $0xd0] sm:$0xff]
    %v121 = vld [vmem:[#allocation6 + $0xd8] sm:$0xff]
    %v122 = vld [vmem:[#allocation6 + $0xe0] sm:$0xff]
    %v123 = vld [vmem:[#allocation6 + $0xe8] sm:$0xff]
    %v124 = vld [vmem:[#allocation6 + $0xf0] sm:$0xff]
    %v125 = vld [vmem:[#allocation6 + $0xf8] sm:$0xff]
    %v126 = vld [vmem:[#allocation6 + $0x100] sm:$0xff]
    %v127 = vld [vmem:[#allocation6 + $0x108] sm:$0xff]
    %v128 = vld [vmem:[#allocation6 + $0x110] sm:$0xff]
    %v129 = vld [vmem:[#allocation6 + $0x118] sm:$0xff]
    %v130 = vld [vmem:[#allocation6 + $0x120] sm:$0xff]
    %v131 = vld [vmem:[#allocation6 + $0x128] sm:$0xff]
    %v132 = vld [vmem:[#allocation6 + $0x130] sm:$0xff]
    %v133 = vld [vmem:[#allocation6 + $0x138] sm:$0xff]
    %v134 = vld [vmem:[#allocation6 + $0x140] sm:$0xff]
    %v135 = vld [vmem:[#allocation6 + $0x148] sm:$0xff]
    %v136 = vld [vmem:[#allocation6 + $0x150] sm:$0xff]
    %v137 = vld [vmem:[#allocation6 + $0x158] sm:$0xff]
    %v138 = vld [vmem:[#allocation6 + $0x160] sm:$0xff]
    %v139 = vld [vmem:[#allocation6 + $0x168] sm:$0xff]
    %v140 = vld [vmem:[#allocation6 + $0x170] sm:$0xff]
    %v141 = vld [vmem:[#allocation6 + $0x178] sm:$0xff]
    %v142 = vld [vmem:[%s2] sm:$0x7]
    %v144 = vlaneseq
    %v145 = vshrl.u32 %v144, 7
    %v146 = vsub.s32 0, %v145
    %v147 = vrot.slane %v142, %v146
    %v148 = vlaneseq
    %v149 = vshrl.u32 %v148, 7
    %v150 = vsub.s32 1, %v149
    %v151 = vrot.slane %v142, %v150
    %v152 = vlaneseq
    %v153 = vshrl.u32 %v152, 7
    %v154 = vsub.s32 2, %v153
    %v155 = vrot.slane %v142, %v154
    %159 = vmatprep.subr.mxu0 %v140
    %160 = vmatpush1.msra.mxu0 %v139
    %161 = vmatprep.subr.mxu0 %v137
    %162 = vmatpush1.msra.mxu0 %v136
    %163 = vmatprep.subr.mxu0 %v134
    %164 = vmatpush1.msra.mxu0 %v133
    %165 = vmatprep.subr.mxu0 %v131
    %166 = vmatpush1.msra.mxu0 %v130
    %167 = vmatprep.subr.mxu0 %v128
    %168 = vmatpush1.msra.mxu0 %v127
    %169 = vmatprep.subr.mxu0 %v125
    %170 = vmatpush1.msra.mxu0 %v124
    %171 = vmatprep.subr.mxu0 %v122
    %172 = vmatpush1.msra.mxu0 %v121
    %173 = vmatprep.subr.mxu0 %v119
    %174 = vmatpush1.msra.mxu0 %v118
    %175 = vmatprep.subr.mxu0 %v116
    %176 = vmatpush1.msra.mxu0 %v115
    %177 = vmatprep.subr.mxu0 %v113
    %178 = vmatpush1.msra.mxu0 %v112
    %179 = vmatprep.subr.mxu0 %v110
    %180 = vmatpush1.msra.mxu0 %v109
    %181 = vmatprep.subr.mxu0 %v107
    %182 = vmatpush1.msra.mxu0 %v106
    %183 = vmatprep.subr.mxu0 %v104
    %184 = vmatpush1.msra.mxu0 %v103
    %185 = vmatprep.subr.mxu0 %v101
    %186 = vmatpush1.msra.mxu0 %v100
    %187 = vmatprep.subr.mxu0 %v98
    %188 = vmatpush1.msra.mxu0 %v97
    %189 = vmatprep.subr.mxu0 %v95
    %190 = vmatpush1.msra.mxu0 %v94
    %191 = vmatprep.subr.mxu0 0.0
    %192 = vmatpush2.msra.mxu0 0.0
    %193 = vmatprep.subr.mxu0 0.0
    %194 = vmatpush2.msra.mxu0 0.0
    %195 = vmatprep.subr.mxu0 0.0
    %196 = vmatpush2.msra.mxu0 0.0
    %197 = vmatprep.subr.mxu0 0.0
    %198 = vmatpush2.msra.mxu0 0.0
    %199 = vmatprep.subr.mxu0 0.0
    %200 = vmatpush2.msra.mxu0 0.0
    %201 = vmatprep.subr.mxu0 0.0
    %202 = vmatpush2.msra.mxu0 0.0
    %203 = vmatprep.subr.mxu0 0.0
    %204 = vmatpush2.msra.mxu0 0.0
    %205 = vmatprep.subr.mxu0 0.0
    %206 = vmatpush2.msra.mxu0 0.0
    %207 = vmatprep.subr.mxu0 0.0
    %208 = vmatpush2.msra.mxu0 0.0
    %209 = vmatprep.subr.mxu0 0.0
    %210 = vmatpush2.msra.mxu0 0.0
    %211 = vmatprep.subr.mxu0 0.0
    %212 = vmatpush2.msra.mxu0 0.0
    %213 = vmatprep.subr.mxu0 0.0
    %214 = vmatpush2.msra.mxu0 0.0
    %215 = vmatprep.subr.mxu0 0.0
    %216 = vmatpush2.msra.mxu0 0.0
    %217 = vmatprep.subr.mxu0 0.0
    %218 = vmatpush2.msra.mxu0 0.0
    %219 = vmatprep.subr.mxu0 0.0
    %220 = vmatpush2.msra.mxu0 0.0
    %221 = vmatprep.subr.mxu0 0.0
    %222 = vmatpush2.msra.mxu0 0.0
    %223 = vmatprep.mubr.f32.mxu0 0.0
    %224 = vmatmul.mubr.f32.gmra.mxu0 %v93
    %v225 = vpop.f32.mrf.mxu0
    %v226 = vadd.f32 %v147, %v225
    %v227 = vpop.f32.mrf.mxu0
    %v228 = vadd.f32 %v151, %v227
    %229 = vdwg.mxu0
    %230 = vmatprep.subr.mxu0 0.0
    %231 = vmatpush1.msra.mxu0 %v141
    %232 = vmatprep.subr.mxu0 0.0
    %233 = vmatpush1.msra.mxu0 %v138
    %234 = vmatprep.subr.mxu0 0.0
    %235 = vmatpush1.msra.mxu0 %v135
    %236 = vmatprep.subr.mxu0 0.0
    %237 = vmatpush1.msra.mxu0 %v132
    %238 = vmatprep.subr.mxu0 0.0
    %239 = vmatpush1.msra.mxu0 %v129
    %240 = vmatprep.subr.mxu0 0.0
    %241 = vmatpush1.msra.mxu0 %v126
    %242 = vmatprep.subr.mxu0 0.0
    %243 = vmatpush1.msra.mxu0 %v123
    %244 = vmatprep.subr.mxu0 0.0
    %245 = vmatpush1.msra.mxu0 %v120
    %246 = vmatprep.subr.mxu0 0.0
    %247 = vmatpush1.msra.mxu0 %v117
    %248 = vmatprep.subr.mxu0 0.0
    %249 = vmatpush1.msra.mxu0 %v114
    %250 = vmatprep.subr.mxu0 0.0
    %251 = vmatpush1.msra.mxu0 %v111
    %252 = vmatprep.subr.mxu0 0.0
    %253 = vmatpush1.msra.mxu0 %v108
    %254 = vmatprep.subr.mxu0 0.0
    %255 = vmatpush1.msra.mxu0 %v105
    %256 = vmatprep.subr.mxu0 0.0
    %257 = vmatpush1.msra.mxu0 %v102
    %258 = vmatprep.subr.mxu0 0.0
    %259 = vmatpush1.msra.mxu0 %v99
    %260 = vmatprep.subr.mxu0 0.0
    %261 = vmatpush1.msra.mxu0 %v96
    %262 = vmatprep.subr.mxu0 0.0
    %263 = vmatpush2.msra.mxu0 0.0
    %264 = vmatprep.subr.mxu0 0.0
    %265 = vmatpush2.msra.mxu0 0.0
    %266 = vmatprep.subr.mxu0 0.0
    %267 = vmatpush2.msra.mxu0 0.0
    %268 = vmatprep.subr.mxu0 0.0
    %269 = vmatpush2.msra.mxu0 0.0
    %270 = vmatprep.subr.mxu0 0.0
    %271 = vmatpush2.msra.mxu0 0.0
    %272 = vmatprep.subr.mxu0 0.0
    %273 = vmatpush2.msra.mxu0 0.0
    %274 = vmatprep.subr.mxu0 0.0
    %275 = vmatpush2.msra.mxu0 0.0
    %276 = vmatprep.subr.mxu0 0.0
    %277 = vmatpush2.msra.mxu0 0.0
    %278 = vmatprep.subr.mxu0 0.0
    %279 = vmatpush2.msra.mxu0 0.0
    %280 = vmatprep.subr.mxu0 0.0
    %281 = vmatpush2.msra.mxu0 0.0
    %282 = vmatprep.subr.mxu0 0.0
    %283 = vmatpush2.msra.mxu0 0.0
    %284 = vmatprep.subr.mxu0 0.0
    %285 = vmatpush2.msra.mxu0 0.0
    %286 = vmatprep.subr.mxu0 0.0
    %287 = vmatpush2.msra.mxu0 0.0
    %288 = vmatprep.subr.mxu0 0.0
    %289 = vmatpush2.msra.mxu0 0.0
    %290 = vmatprep.subr.mxu0 0.0
    %291 = vmatpush2.msra.mxu0 0.0
    %292 = vmatprep.subr.mxu0 0.0
    %293 = vmatpush2.msra.mxu0 0.0
    %294 = vmatprep.mubr.f32.mxu0 0.0
    %295 = vmatmul.mubr.f32.gmra.mxu0 %v93
    %v296 = vpop.f32.mrf.mxu0
    %v297 = vadd.f32 %v155, %v296
    %v298 = vpop.f32.mrf.mxu0
    %299 = vdwg.mxu0
    %300 = vst [vmem:[#allocation2] sm:$0xff] %v226
    %301 = vst [vmem:[#allocation2 + $0x8] sm:$0xff] %v228
    %302 = vst [vmem:[#allocation2 + $0x10] sm:$0xff] %v297
    %v303 = vld [vmem:[#allocation2] sm:$0xff]
    %v304 = vtanh.pop %v303
    %v305 = vld [vmem:[#allocation11] sm:$0xff]
    %v306 = vld [vmem:[#allocation11 + $0x8] sm:$0xff]
    %v307 = vld [vmem:[#allocation11 + $0x10] sm:$0xff]
    %v308 = vld [vmem:[#allocation11 + $0x18] sm:$0xff]
    %v309 = vld [vmem:[#allocation11 + $0x20] sm:$0xff]
    %v310 = vld [vmem:[#allocation11 + $0x28] sm:$0xff]
    %v311 = vld [vmem:[#allocation11 + $0x30] sm:$0xff]
    %v312 = vld [vmem:[#allocation11 + $0x38] sm:$0xff]
    %v313 = vld [vmem:[#allocation11 + $0x40] sm:$0xff]
    %v314 = vld [vmem:[#allocation11 + $0x48] sm:$0xff]
    %v315 = vld [vmem:[#allocation11 + $0x50] sm:$0xff]
    %v316 = vld [vmem:[#allocation11 + $0x58] sm:$0xff]
    %v317 = vld [vmem:[#allocation11 + $0x60] sm:$0xff]
    %v318 = vld [vmem:[#allocation11 + $0x68] sm:$0xff]
    %v319 = vld [vmem:[#allocation11 + $0x70] sm:$0xff]
    %v320 = vld [vmem:[#allocation11 + $0x78] sm:$0xff]
    %v321 = vld [vmem:[%s6] sm:$0x1]
    %v323 = vlaneseq
    %v324 = vshrl.u32 %v323, 7
    %v325 = vsub.s32 0, %v324
    %v326 = vrot.slane %v321, %v325
    %328 = vmatprep.subr.mxu0 0.0
    %329 = vmatpush1.msra.mxu0 %v320
    %330 = vmatprep.subr.mxu0 0.0
    %331 = vmatpush1.msra.mxu0 %v319
    %332 = vmatprep.subr.mxu0 0.0
    %333 = vmatpush1.msra.mxu0 %v318
    %334 = vmatprep.subr.mxu0 0.0
    %335 = vmatpush1.msra.mxu0 %v317
    %336 = vmatprep.subr.mxu0 0.0
    %337 = vmatpush1.msra.mxu0 %v316
    %338 = vmatprep.subr.mxu0 0.0
    %339 = vmatpush1.msra.mxu0 %v315
    %340 = vmatprep.subr.mxu0 0.0
    %341 = vmatpush1.msra.mxu0 %v314
    %342 = vmatprep.subr.mxu0 0.0
    %343 = vmatpush1.msra.mxu0 %v313
    %344 = vmatprep.subr.mxu0 0.0
    %345 = vmatpush1.msra.mxu0 %v312
    %346 = vmatprep.subr.mxu0 0.0
    %347 = vmatpush1.msra.mxu0 %v311
    %348 = vmatprep.subr.mxu0 0.0
    %349 = vmatpush1.msra.mxu0 %v310
    %350 = vmatprep.subr.mxu0 0.0
    %351 = vmatpush1.msra.mxu0 %v309
    %352 = vmatprep.subr.mxu0 0.0
    %353 = vmatpush1.msra.mxu0 %v308
    %354 = vmatprep.subr.mxu0 0.0
    %355 = vmatpush1.msra.mxu0 %v307
    %356 = vmatprep.subr.mxu0 0.0
    %357 = vmatpush1.msra.mxu0 %v306
    %358 = vmatprep.subr.mxu0 0.0
    %359 = vmatpush1.msra.mxu0 %v305
    %360 = vmatprep.subr.mxu0 0.0
    %361 = vmatpush2.msra.mxu0 0.0
    %362 = vmatprep.subr.mxu0 0.0
    %363 = vmatpush2.msra.mxu0 0.0
    %364 = vmatprep.subr.mxu0 0.0
    %365 = vmatpush2.msra.mxu0 0.0
    %366 = vmatprep.subr.mxu0 0.0
    %367 = vmatpush2.msra.mxu0 0.0
    %368 = vmatprep.subr.mxu0 0.0
    %369 = vmatpush2.msra.mxu0 0.0
    %370 = vmatprep.subr.mxu0 0.0
    %371 = vmatpush2.msra.mxu0 0.0
    %372 = vmatprep.subr.mxu0 0.0
    %373 = vmatpush2.msra.mxu0 0.0
    %374 = vmatprep.subr.mxu0 0.0
    %375 = vmatpush2.msra.mxu0 0.0
    %376 = vmatprep.subr.mxu0 0.0
    %377 = vmatpush2.msra.mxu0 0.0
    %378 = vmatprep.subr.mxu0 0.0
    %379 = vmatpush2.msra.mxu0 0.0
    %380 = vmatprep.subr.mxu0 0.0
    %381 = vmatpush2.msra.mxu0 0.0
    %382 = vmatprep.subr.mxu0 0.0
    %383 = vmatpush2.msra.mxu0 0.0
    %384 = vmatprep.subr.mxu0 0.0
    %385 = vmatpush2.msra.mxu0 0.0
    %386 = vmatprep.subr.mxu0 0.0
    %387 = vmatpush2.msra.mxu0 0.0
    %388 = vmatprep.subr.mxu0 0.0
    %389 = vmatpush2.msra.mxu0 0.0
    %390 = vmatprep.subr.mxu0 0.0
    %391 = vmatpush2.msra.mxu0 0.0
    %392 = vmatprep.mubr.f32.mxu0 0.0
    %393 = vmatmul.mubr.f32.gmra.mxu0 %v304
    %v394 = vpop.f32.mrf.mxu0
    %v395 = vadd.f32 %v326, %v394
    %v396 = vpop.f32.mrf.mxu0
    %397 = vdwg.mxu0
    %398 = vst [vmem:[#allocation12] sm:$0xff] %v395
    %v399 = vld [vmem:[#allocation8] sm:$0xff]
    %v400 = vld [vmem:[#allocation8 + $0x8] sm:$0xff]
    %v401 = vld [vmem:[#allocation8 + $0x10] sm:$0xff]
    %v402 = vld [vmem:[#allocation8 + $0x18] sm:$0xff]
    %v403 = vld [vmem:[#allocation8 + $0x20] sm:$0xff]
    %v404 = vld [vmem:[#allocation8 + $0x28] sm:$0xff]
    %v405 = vld [vmem:[#allocation8 + $0x30] sm:$0xff]
    %v406 = vld [vmem:[#allocation8 + $0x38] sm:$0xff]
    %v407 = vld [vmem:[#allocation8 + $0x40] sm:$0xff]
    %v408 = vld [vmem:[#allocation8 + $0x48] sm:$0xff]
    %v409 = vld [vmem:[#allocation8 + $0x50] sm:$0xff]
    %v410 = vld [vmem:[#allocation8 + $0x58] sm:$0xff]
    %v411 = vld [vmem:[#allocation8 + $0x60] sm:$0xff]
    %v412 = vld [vmem:[#allocation8 + $0x68] sm:$0xff]
    %v413 = vld [vmem:[#allocation8 + $0x70] sm:$0xff]
    %v414 = vld [vmem:[#allocation8 + $0x78] sm:$0xff]
    %v415 = vld [vmem:[#allocation9] sm:$0x1]
    %v417 = vlaneseq
    %v418 = vshrl.u32 %v417, 7
    %v419 = vsub.s32 0, %v418
    %v420 = vrot.slane %v415, %v419
    %422 = vmatprep.subr.mxu0 0.0
    %423 = vmatpush1.msra.mxu0 %v414
    %424 = vmatprep.subr.mxu0 0.0
    %425 = vmatpush1.msra.mxu0 %v413
    %426 = vmatprep.subr.mxu0 0.0
    %427 = vmatpush1.msra.mxu0 %v412
    %428 = vmatprep.subr.mxu0 0.0
    %429 = vmatpush1.msra.mxu0 %v411
    %430 = vmatprep.subr.mxu0 0.0
    %431 = vmatpush1.msra.mxu0 %v410
    %432 = vmatprep.subr.mxu0 0.0
    %433 = vmatpush1.msra.mxu0 %v409
    %434 = vmatprep.subr.mxu0 0.0
    %435 = vmatpush1.msra.mxu0 %v408
    %436 = vmatprep.subr.mxu0 0.0
    %437 = vmatpush1.msra.mxu0 %v407
    %438 = vmatprep.subr.mxu0 0.0
    %439 = vmatpush1.msra.mxu0 %v406
    %440 = vmatprep.subr.mxu0 0.0
    %441 = vmatpush1.msra.mxu0 %v405
    %442 = vmatprep.subr.mxu0 0.0
    %443 = vmatpush1.msra.mxu0 %v404
    %444 = vmatprep.subr.mxu0 0.0
    %445 = vmatpush1.msra.mxu0 %v403
    %446 = vmatprep.subr.mxu0 0.0
    %447 = vmatpush1.msra.mxu0 %v402
    %448 = vmatprep.subr.mxu0 0.0
    %449 = vmatpush1.msra.mxu0 %v401
    %450 = vmatprep.subr.mxu0 0.0
    %451 = vmatpush1.msra.mxu0 %v400
    %452 = vmatprep.subr.mxu0 0.0
    %453 = vmatpush1.msra.mxu0 %v399
    %454 = vmatprep.subr.mxu0 0.0
    %455 = vmatpush2.msra.mxu0 0.0
    %456 = vmatprep.subr.mxu0 0.0
    %457 = vmatpush2.msra.mxu0 0.0
    %458 = vmatprep.subr.mxu0 0.0
    %459 = vmatpush2.msra.mxu0 0.0
    %460 = vmatprep.subr.mxu0 0.0
    %461 = vmatpush2.msra.mxu0 0.0
    %462 = vmatprep.subr.mxu0 0.0
    %463 = vmatpush2.msra.mxu0 0.0
    %464 = vmatprep.subr.mxu0 0.0
    %465 = vmatpush2.msra.mxu0 0.0
    %466 = vmatprep.subr.mxu0 0.0
    %467 = vmatpush2.msra.mxu0 0.0
    %468 = vmatprep.subr.mxu0 0.0
    %469 = vmatpush2.msra.mxu0 0.0
    %470 = vmatprep.subr.mxu0 0.0
    %471 = vmatpush2.msra.mxu0 0.0
    %472 = vmatprep.subr.mxu0 0.0
    %473 = vmatpush2.msra.mxu0 0.0
    %474 = vmatprep.subr.mxu0 0.0
    %475 = vmatpush2.msra.mxu0 0.0
    %476 = vmatprep.subr.mxu0 0.0
    %477 = vmatpush2.msra.mxu0 0.0
    %478 = vmatprep.subr.mxu0 0.0
    %479 = vmatpush2.msra.mxu0 0.0
    %480 = vmatprep.subr.mxu0 0.0
    %481 = vmatpush2.msra.mxu0 0.0
    %482 = vmatprep.subr.mxu0 0.0
    %483 = vmatpush2.msra.mxu0 0.0
    %484 = vmatprep.subr.mxu0 0.0
    %485 = vmatpush2.msra.mxu0 0.0
    %486 = vmatprep.mubr.f32.mxu0 0.0
    %487 = vmatmul.mubr.f32.gmra.mxu0 %v304
    %v488 = vpop.f32.mrf.mxu0
    %v489 = vadd.f32 %v420, %v488
    %v490 = vpop.f32.mrf.mxu0
    %491 = vdwg.mxu0
    %v492 = vld [vmem:[#allocation2 + $0x8] sm:$0xff]
    %v493 = vadd.f32 %v492, %v489
    %v494 = vtanh.pop %v493
    %s495 = scalar_lea.vmem [#allocation11], 128
    %v496 = vld [vmem:[%s495] sm:$0xff]
    %v497 = vld [vmem:[%s495 + $0x8] sm:$0xff]
    %v498 = vld [vmem:[%s495 + $0x10] sm:$0xff]
    %v499 = vld [vmem:[%s495 + $0x18] sm:$0xff]
    %v500 = vld [vmem:[%s495 + $0x20] sm:$0xff]
    %v501 = vld [vmem:[%s495 + $0x28] sm:$0xff]
    %v502 = vld [vmem:[%s495 + $0x30] sm:$0xff]
    %v503 = vld [vmem:[%s495 + $0x38] sm:$0xff]
    %v504 = vld [vmem:[%s495 + $0x40] sm:$0xff]
    %v505 = vld [vmem:[%s495 + $0x48] sm:$0xff]
    %v506 = vld [vmem:[%s495 + $0x50] sm:$0xff]
    %v507 = vld [vmem:[%s495 + $0x58] sm:$0xff]
    %v508 = vld [vmem:[%s495 + $0x60] sm:$0xff]
    %v509 = vld [vmem:[%s495 + $0x68] sm:$0xff]
    %v510 = vld [vmem:[%s495 + $0x70] sm:$0xff]
    %v511 = vld [vmem:[%s495 + $0x78] sm:$0xff]
    %512 = vmatprep.subr.mxu0 0.0
    %513 = vmatpush1.msra.mxu0 %v511
    %514 = vmatprep.subr.mxu0 0.0
    %515 = vmatpush1.msra.mxu0 %v510
    %516 = vmatprep.subr.mxu0 0.0
    %517 = vmatpush1.msra.mxu0 %v509
    %518 = vmatprep.subr.mxu0 0.0
    %519 = vmatpush1.msra.mxu0 %v508
    %520 = vmatprep.subr.mxu0 0.0
    %521 = vmatpush1.msra.mxu0 %v507
    %522 = vmatprep.subr.mxu0 0.0
    %523 = vmatpush1.msra.mxu0 %v506
    %524 = vmatprep.subr.mxu0 0.0
    %525 = vmatpush1.msra.mxu0 %v505
    %526 = vmatprep.subr.mxu0 0.0
    %527 = vmatpush1.msra.mxu0 %v504
    %528 = vmatprep.subr.mxu0 0.0
    %529 = vmatpush1.msra.mxu0 %v503
    %530 = vmatprep.subr.mxu0 0.0
    %531 = vmatpush1.msra.mxu0 %v502
    %532 = vmatprep.subr.mxu0 0.0
    %533 = vmatpush1.msra.mxu0 %v501
    %534 = vmatprep.subr.mxu0 0.0
    %535 = vmatpush1.msra.mxu0 %v500
    %536 = vmatprep.subr.mxu0 0.0
    %537 = vmatpush1.msra.mxu0 %v499
    %538 = vmatprep.subr.mxu0 0.0
    %539 = vmatpush1.msra.mxu0 %v498
    %540 = vmatprep.subr.mxu0 0.0
    %541 = vmatpush1.msra.mxu0 %v497
    %542 = vmatprep.subr.mxu0 0.0
    %543 = vmatpush1.msra.mxu0 %v496
    %544 = vmatprep.subr.mxu0 0.0
    %545 = vmatpush2.msra.mxu0 0.0
    %546 = vmatprep.subr.mxu0 0.0
    %547 = vmatpush2.msra.mxu0 0.0
    %548 = vmatprep.subr.mxu0 0.0
    %549 = vmatpush2.msra.mxu0 0.0
    %550 = vmatprep.subr.mxu0 0.0
    %551 = vmatpush2.msra.mxu0 0.0
    %552 = vmatprep.subr.mxu0 0.0
    %553 = vmatpush2.msra.mxu0 0.0
    %554 = vmatprep.subr.mxu0 0.0
    %555 = vmatpush2.msra.mxu0 0.0
    %556 = vmatprep.subr.mxu0 0.0
    %557 = vmatpush2.msra.mxu0 0.0
    %558 = vmatprep.subr.mxu0 0.0
    %559 = vmatpush2.msra.mxu0 0.0
    %560 = vmatprep.subr.mxu0 0.0
    %561 = vmatpush2.msra.mxu0 0.0
    %562 = vmatprep.subr.mxu0 0.0
    %563 = vmatpush2.msra.mxu0 0.0
    %564 = vmatprep.subr.mxu0 0.0
    %565 = vmatpush2.msra.mxu0 0.0
    %566 = vmatprep.subr.mxu0 0.0
    %567 = vmatpush2.msra.mxu0 0.0
    %568 = vmatprep.subr.mxu0 0.0
    %569 = vmatpush2.msra.mxu0 0.0
    %570 = vmatprep.subr.mxu0 0.0
    %571 = vmatpush2.msra.mxu0 0.0
    %572 = vmatprep.subr.mxu0 0.0
    %573 = vmatpush2.msra.mxu0 0.0
    %574 = vmatprep.subr.mxu0 0.0
    %575 = vmatpush2.msra.mxu0 0.0
    %576 = vmatprep.mubr.f32.mxu0 0.0
    %577 = vmatmul.mubr.f32.gmra.mxu0 %v494
    %v578 = vpop.f32.mrf.mxu0
    %v579 = vadd.f32 0.0, %v578
    %v580 = vpop.f32.mrf.mxu0
    %581 = vdwg.mxu0
    %v582 = vadd.f32 %v395, %v579
    %s583 = scalar_lea.vmem %s6, 1
    %v584 = vld [vmem:[%s583] sm:$0x1]
    %v586 = vlaneseq
    %v587 = vshrl.u32 %v586, 7
    %v588 = vsub.s32 0, %v587
    %v589 = vrot.slane %v584, %v588
    %v591 = vadd.f32 %v582, %v589
    %s592 = scalar_lea.vmem [#allocation12], 8
    %593 = vst [vmem:[%s592] sm:$0xff] %v591
    %s594 = scalar_lea.vmem [#allocation8], 128
    %v595 = vld [vmem:[%s594] sm:$0xff]
    %v596 = vld [vmem:[%s594 + $0x8] sm:$0xff]
    %v597 = vld [vmem:[%s594 + $0x10] sm:$0xff]
    %v598 = vld [vmem:[%s594 + $0x18] sm:$0xff]
    %v599 = vld [vmem:[%s594 + $0x20] sm:$0xff]
    %v600 = vld [vmem:[%s594 + $0x28] sm:$0xff]
    %v601 = vld [vmem:[%s594 + $0x30] sm:$0xff]
    %v602 = vld [vmem:[%s594 + $0x38] sm:$0xff]
    %v603 = vld [vmem:[%s594 + $0x40] sm:$0xff]
    %v604 = vld [vmem:[%s594 + $0x48] sm:$0xff]
    %v605 = vld [vmem:[%s594 + $0x50] sm:$0xff]
    %v606 = vld [vmem:[%s594 + $0x58] sm:$0xff]
    %v607 = vld [vmem:[%s594 + $0x60] sm:$0xff]
    %v608 = vld [vmem:[%s594 + $0x68] sm:$0xff]
    %v609 = vld [vmem:[%s594 + $0x70] sm:$0xff]
    %v610 = vld [vmem:[%s594 + $0x78] sm:$0xff]
    %s611 = scalar_lea.vmem [#allocation9], 1
    %v612 = vld [vmem:[%s611] sm:$0x1]
    %v614 = vlaneseq
    %v615 = vshrl.u32 %v614, 7
    %v616 = vsub.s32 0, %v615
    %v617 = vrot.slane %v612, %v616
    %619 = vmatprep.subr.mxu0 0.0
    %620 = vmatpush1.msra.mxu0 %v610
    %621 = vmatprep.subr.mxu0 0.0
    %622 = vmatpush1.msra.mxu0 %v609
    %623 = vmatprep.subr.mxu0 0.0
    %624 = vmatpush1.msra.mxu0 %v608
    %625 = vmatprep.subr.mxu0 0.0
    %626 = vmatpush1.msra.mxu0 %v607
    %627 = vmatprep.subr.mxu0 0.0
    %628 = vmatpush1.msra.mxu0 %v606
    %629 = vmatprep.subr.mxu0 0.0
    %630 = vmatpush1.msra.mxu0 %v605
    %631 = vmatprep.subr.mxu0 0.0
    %632 = vmatpush1.msra.mxu0 %v604
    %633 = vmatprep.subr.mxu0 0.0
    %634 = vmatpush1.msra.mxu0 %v603
    %635 = vmatprep.subr.mxu0 0.0
    %636 = vmatpush1.msra.mxu0 %v602
    %637 = vmatprep.subr.mxu0 0.0
    %638 = vmatpush1.msra.mxu0 %v601
    %639 = vmatprep.subr.mxu0 0.0
    %640 = vmatpush1.msra.mxu0 %v600
    %641 = vmatprep.subr.mxu0 0.0
    %642 = vmatpush1.msra.mxu0 %v599
    %643 = vmatprep.subr.mxu0 0.0
    %644 = vmatpush1.msra.mxu0 %v598
    %645 = vmatprep.subr.mxu0 0.0
    %646 = vmatpush1.msra.mxu0 %v597
    %647 = vmatprep.subr.mxu0 0.0
    %648 = vmatpush1.msra.mxu0 %v596
    %649 = vmatprep.subr.mxu0 0.0
    %650 = vmatpush1.msra.mxu0 %v595
    %651 = vmatprep.subr.mxu0 0.0
    %652 = vmatpush2.msra.mxu0 0.0
    %653 = vmatprep.subr.mxu0 0.0
    %654 = vmatpush2.msra.mxu0 0.0
    %655 = vmatprep.subr.mxu0 0.0
    %656 = vmatpush2.msra.mxu0 0.0
    %657 = vmatprep.subr.mxu0 0.0
    %658 = vmatpush2.msra.mxu0 0.0
    %659 = vmatprep.subr.mxu0 0.0
    %660 = vmatpush2.msra.mxu0 0.0
    %661 = vmatprep.subr.mxu0 0.0
    %662 = vmatpush2.msra.mxu0 0.0
    %663 = vmatprep.subr.mxu0 0.0
    %664 = vmatpush2.msra.mxu0 0.0
    %665 = vmatprep.subr.mxu0 0.0
    %666 = vmatpush2.msra.mxu0 0.0
    %667 = vmatprep.subr.mxu0 0.0
    %668 = vmatpush2.msra.mxu0 0.0
    %669 = vmatprep.subr.mxu0 0.0
    %670 = vmatpush2.msra.mxu0 0.0
    %671 = vmatprep.subr.mxu0 0.0
    %672 = vmatpush2.msra.mxu0 0.0
    %673 = vmatprep.subr.mxu0 0.0
    %674 = vmatpush2.msra.mxu0 0.0
    %675 = vmatprep.subr.mxu0 0.0
    %676 = vmatpush2.msra.mxu0 0.0
    %677 = vmatprep.subr.mxu0 0.0
    %678 = vmatpush2.msra.mxu0 0.0
    %679 = vmatprep.subr.mxu0 0.0
    %680 = vmatpush2.msra.mxu0 0.0
    %681 = vmatprep.subr.mxu0 0.0
    %682 = vmatpush2.msra.mxu0 0.0
    %683 = vmatprep.mubr.f32.mxu0 0.0
    %684 = vmatmul.mubr.f32.gmra.mxu0 %v494
    %v685 = vpop.f32.mrf.mxu0
    %v686 = vadd.f32 %v617, %v685
    %v687 = vpop.f32.mrf.mxu0
    %688 = vdwg.mxu0
    %v689 = vld [vmem:[#allocation2 + $0x10] sm:$0xff]
    %v690 = vadd.f32 %v689, %v686
    %v691 = vtanh.pop %v690
    %s692 = scalar_lea.vmem [#allocation11], 256
    %v693 = vld [vmem:[%s692] sm:$0xff]
    %v694 = vld [vmem:[%s692 + $0x8] sm:$0xff]
    %v695 = vld [vmem:[%s692 + $0x10] sm:$0xff]
    %v696 = vld [vmem:[%s692 + $0x18] sm:$0xff]
    %v697 = vld [vmem:[%s692 + $0x20] sm:$0xff]
    %v698 = vld [vmem:[%s692 + $0x28] sm:$0xff]
    %v699 = vld [vmem:[%s692 + $0x30] sm:$0xff]
    %v700 = vld [vmem:[%s692 + $0x38] sm:$0xff]
    %v701 = vld [vmem:[%s692 + $0x40] sm:$0xff]
    %v702 = vld [vmem:[%s692 + $0x48] sm:$0xff]
    %v703 = vld [vmem:[%s692 + $0x50] sm:$0xff]
    %v704 = vld [vmem:[%s692 + $0x58] sm:$0xff]
    %v705 = vld [vmem:[%s692 + $0x60] sm:$0xff]
    %v706 = vld [vmem:[%s692 + $0x68] sm:$0xff]
    %v707 = vld [vmem:[%s692 + $0x70] sm:$0xff]
    %v708 = vld [vmem:[%s692 + $0x78] sm:$0xff]
    %709 = vmatprep.subr.mxu0 0.0
    %710 = vmatpush1.msra.mxu0 %v708
    %711 = vmatprep.subr.mxu0 0.0
    %712 = vmatpush1.msra.mxu0 %v707
    %713 = vmatprep.subr.mxu0 0.0
    %714 = vmatpush1.msra.mxu0 %v706
    %715 = vmatprep.subr.mxu0 0.0
    %716 = vmatpush1.msra.mxu0 %v705
    %717 = vmatprep.subr.mxu0 0.0
    %718 = vmatpush1.msra.mxu0 %v704
    %719 = vmatprep.subr.mxu0 0.0
    %720 = vmatpush1.msra.mxu0 %v703
    %721 = vmatprep.subr.mxu0 0.0
    %722 = vmatpush1.msra.mxu0 %v702
    %723 = vmatprep.subr.mxu0 0.0
    %724 = vmatpush1.msra.mxu0 %v701
    %725 = vmatprep.subr.mxu0 0.0
    %726 = vmatpush1.msra.mxu0 %v700
    %727 = vmatprep.subr.mxu0 0.0
    %728 = vmatpush1.msra.mxu0 %v699
    %729 = vmatprep.subr.mxu0 0.0
    %730 = vmatpush1.msra.mxu0 %v698
    %731 = vmatprep.subr.mxu0 0.0
    %732 = vmatpush1.msra.mxu0 %v697
    %733 = vmatprep.subr.mxu0 0.0
    %734 = vmatpush1.msra.mxu0 %v696
    %735 = vmatprep.subr.mxu0 0.0
    %736 = vmatpush1.msra.mxu0 %v695
    %737 = vmatprep.subr.mxu0 0.0
    %738 = vmatpush1.msra.mxu0 %v694
    %739 = vmatprep.subr.mxu0 0.0
    %740 = vmatpush1.msra.mxu0 %v693
    %741 = vmatprep.subr.mxu0 0.0
    %742 = vmatpush2.msra.mxu0 0.0
    %743 = vmatprep.subr.mxu0 0.0
    %744 = vmatpush2.msra.mxu0 0.0
    %745 = vmatprep.subr.mxu0 0.0
    %746 = vmatpush2.msra.mxu0 0.0
    %747 = vmatprep.subr.mxu0 0.0
    %748 = vmatpush2.msra.mxu0 0.0
    %749 = vmatprep.subr.mxu0 0.0
    %750 = vmatpush2.msra.mxu0 0.0
    %751 = vmatprep.subr.mxu0 0.0
    %752 = vmatpush2.msra.mxu0 0.0
    %753 = vmatprep.subr.mxu0 0.0
    %754 = vmatpush2.msra.mxu0 0.0
    %755 = vmatprep.subr.mxu0 0.0
    %756 = vmatpush2.msra.mxu0 0.0
    %757 = vmatprep.subr.mxu0 0.0
    %758 = vmatpush2.msra.mxu0 0.0
    %759 = vmatprep.subr.mxu0 0.0
    %760 = vmatpush2.msra.mxu0 0.0
    %761 = vmatprep.subr.mxu0 0.0
    %762 = vmatpush2.msra.mxu0 0.0
    %763 = vmatprep.subr.mxu0 0.0
    %764 = vmatpush2.msra.mxu0 0.0
    %765 = vmatprep.subr.mxu0 0.0
    %766 = vmatpush2.msra.mxu0 0.0
    %767 = vmatprep.subr.mxu0 0.0
    %768 = vmatpush2.msra.mxu0 0.0
    %769 = vmatprep.subr.mxu0 0.0
    %770 = vmatpush2.msra.mxu0 0.0
    %771 = vmatprep.subr.mxu0 0.0
    %772 = vmatpush2.msra.mxu0 0.0
    %773 = vmatprep.mubr.f32.mxu0 0.0
    %774 = vmatmul.mubr.f32.gmra.mxu0 %v691
    %v775 = vpop.f32.mrf.mxu0
    %v776 = vadd.f32 0.0, %v775
    %v777 = vpop.f32.mrf.mxu0
    %778 = vdwg.mxu0
    %v779 = vadd.f32 %v591, %v776
    %s780 = scalar_lea.vmem %s6, 2
    %v781 = vld [vmem:[%s780] sm:$0x1]
    %v783 = vlaneseq
    %v784 = vshrl.u32 %v783, 7
    %v785 = vsub.s32 0, %v784
    %v786 = vrot.slane %v781, %v785
    %v788 = vadd.f32 %v779, %v786
    %s789 = scalar_lea.vmem [#allocation12], 16
    %790 = vst [vmem:[%s789] sm:$0xff] %v788
    // Predicated region
    $region50: #{tpu_custom_call.1} parent=1 // pred_check
      _
    $region51: #{tpu_custom_call.1} parent=1 // pred_check_branch
      %792 = sbr.rel (0) target = $region53
    $region52: #{tpu_custom_call.1} parent=1 // pred_region
      %s794 = ssub.s32 384, 384
      %795 = vsyncadd [#allocation5], %s794
      %s796 = sshll.u32 [#allocation12], 4
      %s797 = int_to_ptr.vmem [resolvable:$true] %s796
      %802 = dma.vmem_to_hbm [thread:$0]  %s797, 384, %s7, [#allocation5], 128, 128, 8
    $region53: #{tpu_custom_call.1} parent=1 // pred_fallthru
      _
    // Predicated region
    $region54: #{tpu_custom_call.1} parent=1 // pred_check
      _
    $region55: #{tpu_custom_call.1} parent=1 // pred_check_branch
      %804 = sbr.rel (0) target = $region57
    $region56: #{tpu_custom_call.1} parent=1 // pred_region
      %805 = dma.done [#allocation5], 384
    $region57: #{tpu_custom_call.1} parent=1 // pred_fallthru
      _
    %806 = vsyncpa [#allocation4], 1
    %807 = vsyncpa [#allocation7], 1
    %808 = vsyncpa [#allocation10], 1
    %809 = vsyncpa [#allocation5], 1

</llo_original>
